<compile_context>
chip_gen: v5e
topology: v5e:2x2
jax: 0.10.0
libtpu: 0.0.40
codegen_flags: <defaults>
</compile_context>

<pallas_src>
import functools

import jax
import jax.numpy as jnp
from jax.experimental import pallas as pl
from jax.experimental.pallas import tpu as pltpu

_LANE = 128
_SUBLANE = 8
_EPS = 1e-30  # guards -log(0); also keeps 0-weight / padded elements finite


def _policy_loss_kernel(pred_ref, w_ref, out_ref, acc_ref, *, n_valid):
    """pred_ref/w_ref: (block_rows, 128) dense flat views of predictions and
    actions*rewards. out_ref: (1,1) SMEM scalar. acc_ref: (1,128) f32 VMEM."""
    i = pl.program_id(0)

    @pl.when(i == 0)
    def _():
        acc_ref[...] = jnp.zeros_like(acc_ref)

    # Cast in-kernel (VPU op, effectively free); all math in f32.
    pred = pred_ref[...].astype(jnp.float32)          # (br, 128)
    w = w_ref[...].astype(jnp.float32)                # (br, 128)
    br = pred.shape[0]

    # Element-index mask for the ragged tail (partial last block / pad region).
    # n_valid = T*A is static, so no scalar prefetch is required.
    row = jax.lax.broadcasted_iota(jnp.int32, (br, _LANE), 0)
    lane = jax.lax.broadcasted_iota(jnp.int32, (br, _LANE), 1)
    elem = (i * br + row) * _LANE + lane
    valid = elem < n_valid

    # Elementwise one-hot form: w[t,a] * (-log(max(pred[t,a], eps))).
    contrib = jnp.where(valid, -jnp.log(jnp.maximum(pred, _EPS)) * w, 0.0)

    # Fold this block into a single-vreg accumulator (sublane-direction reduce);
    # the one cross-lane reduce is deferred to the final grid step.
    acc_ref[...] += jnp.sum(contrib, axis=0, keepdims=True)   # (1, 128)

    @pl.when(i == pl.num_programs(0) - 1)
    def _():
        out_ref[0, 0] = jnp.sum(acc_ref[...])


@functools.partial(jax.jit, static_argnames=("block_rows",))
def policy_loss(predictions, actions, discounted_rewards, *, block_rows=8192):
    """predictions: (T, A) float (f32 or bf16), actions: (T, A) one-hot float,
    discounted_rewards: (T,) float. Returns scalar float32 loss."""
    T, A = predictions.shape
    n = T * A

    # Fold rewards into the one-hot actions: w[t,a] = actions[t,a] * rew[t].
    # One fused XLA elementwise op; removes the separate rewards DMA stream.
    weights = actions * discounted_rewards[:, None]

    # Free (contiguous, row-major) flatten — no transpose, no copy.
    pred_flat = jnp.reshape(predictions, (-1,))
    w_flat = jnp.reshape(weights, (-1,))

    # Dense (rows, 128) view. Pad only to the next 128-element boundary, and
    # only when needed (zero extra copies when T*A % 128 == 0).
    n_rows = (n + _LANE - 1) // _LANE
    n_pad = n_rows * _LANE
    if n_pad != n:
        pred_flat = jnp.pad(pred_flat, (0, n_pad - n))
        w_flat = jnp.pad(w_flat, (0, n_pad - n))
    pred2 = pred_flat.reshape(n_rows, _LANE)
    w2 = w_flat.reshape(n_rows, _LANE)

    # Block sizing: block_rows * 128 lanes, f32 => block_rows * 512 B per
    # stream; x2 streams x2 (double buffering) => block_rows * 2048 B of VMEM.
    # Default 8192 rows => ~16 MiB, safe on v5e/v6e (128 MiB) and v7x (64 MiB).
    if n_rows <= block_rows:
        br = n_rows                       # single block (== full dim is legal)
    else:
        br = max(_SUBLANE, (block_rows // _SUBLANE) * _SUBLANE)
    grid = (pl.cdiv(n_rows, br),)

    kernel = functools.partial(_policy_loss_kernel, n_valid=n)

    out = pl.pallas_call(
        kernel,
        out_shape=jax.ShapeDtypeStruct((1, 1), jnp.float32),
        grid_spec=pltpu.PrefetchScalarGridSpec(
            num_scalar_prefetch=0,
            grid=grid,
            in_specs=[
                pl.BlockSpec((br, _LANE), lambda i: (i, 0)),
                pl.BlockSpec((br, _LANE), lambda i: (i, 0)),
            ],
            # Scalar loss lives in SMEM: no masked vector store / VMEM writeback.
            out_specs=pl.BlockSpec(memory_space=pltpu.MemorySpace.SMEM),
            scratch_shapes=[pltpu.VMEM((1, _LANE), jnp.float32)],
        ),
        compiler_params=pltpu.CompilerParams(
            dimension_semantics=("arbitrary",),        # carried reduction axis
            vmem_limit_bytes=32 * 1024 * 1024,         # explicit on all gens
        ),
    )(pred2, w2)
    return out[0, 0]


def policy_loss_ref(predictions, actions, discounted_rewards):
    prob = jnp.sum(actions * predictions, axis=1)
    return jnp.sum(-jnp.log(prob) * discounted_rewards)


def _make_inputs(key, T, A):
    k1, k2, k3 = jax.random.split(key, 3)
    logits = jax.random.normal(k1, (T, A), dtype=jnp.float32)
    predictions = jax.nn.softmax(logits, axis=1)            # valid probabilities
    action_idx = jax.random.randint(k2, (T,), 0, A)
    actions = jax.nn.one_hot(action_idx, A, dtype=jnp.float32)
    discounted_rewards = jax.random.uniform(k3, (T,), dtype=jnp.float32)
    return predictions, actions, discounted_rewards


if __name__ == "__main__":
    key = jax.random.PRNGKey(0)

    # Cartpole-sized episode: T=8 timesteps, A=2 actions (single tiny block).
    pred, act, rew = _make_inputs(key, T=8, A=2)
    loss = policy_loss(pred, act, rew)
    jax.block_until_ready(loss)
    ref = policy_loss_ref(pred, act, rew)
    assert jnp.allclose(loss, ref, rtol=1e-5, atol=1e-5), (loss, ref)

    # Longer, ragged trajectory: exercises the multi-block reduction grid,
    # a partial last block, and the in-kernel element-index mask.
    pred2, act2, rew2 = _make_inputs(jax.random.PRNGKey(1), T=1300, A=2)
    loss2 = policy_loss(pred2, act2, rew2, block_rows=8)     # grid of 3 blocks
    jax.block_until_ready(loss2)
    ref2 = policy_loss_ref(pred2, act2, rew2)
    assert jnp.allclose(loss2, ref2, rtol=1e-5, atol=1e-3), (loss2, ref2)

    print("KERNEL_OK")
</pallas_src>

<mosaic_0001>
module attributes {stable_mosaic.version = 11 : i64} {
  func.func @_policy_loss_kernel(%arg0: i32, %arg1: memref<1x128xf32, #tpu.memory_space<vmem>>, %arg2: memref<1x128xf32, #tpu.memory_space<vmem>>, %arg3: memref<1x1xf32, #tpu.memory_space<smem>>, %arg4: memref<1x128xf32, #tpu.memory_space<vmem>>) attributes {dimension_semantics = [#tpu.dimension_semantics<arbitrary>], iteration_bounds = array<i64: 1>, scalar_prefetch = 0 : i64, scratch_operands = 1 : i64, tpu.core_type = #tpu.core_type<tc>, window_params = [{transform_indices = @transform_0, window_bounds = array<i64: 1, 128>}, {transform_indices = @transform_1, window_bounds = array<i64: 1, 128>}, {transform_indices = @transform_2, window_bounds = array<i64: 1, 1>}]} {
    %c0_i32 = arith.constant 0 : i32
    %0 = arith.cmpi eq, %arg0, %c0_i32 : i32
    %1 = arith.extui %0 : i1 to i32
    %c0_i32_0 = arith.constant 0 : i32
    %2 = arith.cmpi ne, %1, %c0_i32_0 : i32
    scf.if %2 {
      %cst_13 = arith.constant 0.000000e+00 : f32
      %31 = vector.broadcast %cst_13 : f32 to vector<1x128xf32>
      %c0_14 = arith.constant 0 : index
      %c0_15 = arith.constant 0 : index
      %32 = vector.load %arg4[%c0_14, %c0_15] : memref<1x128xf32, #tpu.memory_space<vmem>>, vector<1x128xf32>
      tpu.vector_store %arg4[%c0_14, %c0_15], %31 {strides = array<i32>} : memref<1x128xf32, #tpu.memory_space<vmem>>, vector<1x128xf32>,
    } else {
    }
    %c0 = arith.constant 0 : index
    %c0_1 = arith.constant 0 : index
    %3 = vector.load %arg1[%c0, %c0_1] : memref<1x128xf32, #tpu.memory_space<vmem>>, vector<1x128xf32>
    %c0_2 = arith.constant 0 : index
    %c0_3 = arith.constant 0 : index
    %4 = vector.load %arg2[%c0_2, %c0_3] : memref<1x128xf32, #tpu.memory_space<vmem>>, vector<1x128xf32>
    %5 = tpu.iota {dimensions = array<i32: 0>} : vector<1x128xi32>
    %6 = tpu.iota {dimensions = array<i32: 1>} : vector<1x128xi32>
    %c1_i32 = arith.constant 1 : i32
    %7 = arith.muli %arg0, %c1_i32 : i32
    %8 = vector.broadcast %7 : i32 to vector<1x128xi32>
    %9 = arith.addi %8, %5 : vector<1x128xi32>
    %c128_i32 = arith.constant 128 : i32
    %10 = vector.broadcast %c128_i32 : i32 to vector<1x128xi32>
    %11 = arith.muli %9, %10 : vector<1x128xi32>
    %12 = arith.addi %11, %6 : vector<1x128xi32>
    %c16_i32 = arith.constant 16 : i32
    %13 = vector.broadcast %c16_i32 : i32 to vector<1x128xi32>
    %14 = arith.cmpi slt, %12, %13 : vector<1x128xi32>
    %cst = arith.constant 1.000000e-30 : f32
    %15 = vector.broadcast %cst : f32 to vector<1x128xf32>
    %16 = arith.maximumf %3, %15 : vector<1x128xf32>
    %17 = math.log %16 : vector<1x128xf32>
    %cst_4 = arith.constant 0.000000e+00 : f32
    %18 = vector.broadcast %cst_4 : f32 to vector<1x128xf32>
    %19 = arith.subf %18, %17 : vector<1x128xf32>
    %20 = arith.mulf %19, %4 : vector<1x128xf32>
    %cst_5 = arith.constant 0.000000e+00 : f32
    %21 = vector.broadcast %cst_5 : f32 to vector<1x128xf32>
    %22 = arith.select %14, %20, %21 : vector<1x128xi1>, vector<1x128xf32>
    %c0_6 = arith.constant 0 : index
    %c0_7 = arith.constant 0 : index
    %23 = vector.load %arg4[%c0_6, %c0_7] : memref<1x128xf32, #tpu.memory_space<vmem>>, vector<1x128xf32>
    %cst_8 = arith.constant dense<0.000000e+00> : vector<128xf32>
    %24 = vector.multi_reduction <add>, %22, %cst_8 [0] : vector<1x128xf32> to vector<128xf32>
    %25 = vector.shape_cast %24 : vector<128xf32> to vector<1x128xf32>
    %26 = arith.addf %23, %25 : vector<1x128xf32>
    %c0_9 = arith.constant 0 : index
    %c0_10 = arith.constant 0 : index
    %27 = vector.load %arg4[%c0_9, %c0_10] : memref<1x128xf32, #tpu.memory_space<vmem>>, vector<1x128xf32>
    tpu.vector_store %arg4[%c0_9, %c0_10], %26 {strides = array<i32>} : memref<1x128xf32, #tpu.memory_space<vmem>>, vector<1x128xf32>,
    %c0_i32_11 = arith.constant 0 : i32
    %28 = arith.cmpi eq, %arg0, %c0_i32_11 : i32
    %29 = arith.extui %28 : i1 to i32
    %c0_i32_12 = arith.constant 0 : i32
    %30 = arith.cmpi ne, %29, %c0_i32_12 : i32
    scf.if %30 {
      %c0_13 = arith.constant 0 : index
      %c0_14 = arith.constant 0 : index
      %31 = vector.load %arg4[%c0_13, %c0_14] : memref<1x128xf32, #tpu.memory_space<vmem>>, vector<1x128xf32>
      %32 = vector.shape_cast %31 : vector<1x128xf32> to vector<1x1x128xf32>
      %cst_15 = arith.constant dense<0.000000e+00> : vector<1xf32>
      %33 = vector.multi_reduction <add>, %32, %cst_15 [1, 2] : vector<1x1x128xf32> to vector<1xf32>
      %34 = vector.shape_cast %33 : vector<1xf32> to vector<1x1x1xf32>
      %35 = vector.extract %34[0, 0, 0] : f32 from vector<1x1x1xf32>
      %c0_16 = arith.constant 0 : index
      %c0_17 = arith.constant 0 : index
      %36 = memref.load %arg3[%c0_16, %c0_17] : memref<1x1xf32, #tpu.memory_space<smem>>
      memref.store %35, %arg3[%c0_16, %c0_17] : memref<1x1xf32, #tpu.memory_space<smem>>
    } else {
    }
    return
  }
  func.func @transform_0(%arg0: i32) -> (i32, i32) {
    %c0_i32 = arith.constant 0 : i32
    %c0_i32_0 = arith.constant 0 : i32
    return %arg0, %c0_i32 : i32, i32
  }
  func.func @transform_1(%arg0: i32) -> (i32, i32) {
    %c0_i32 = arith.constant 0 : i32
    %c0_i32_0 = arith.constant 0 : i32
    return %arg0, %c0_i32 : i32, i32
  }
  func.func @transform_2(%arg0: i32) -> (i32, i32) {
    %c0_i32 = arith.constant 0 : i32
    %c0_i32_0 = arith.constant 0 : i32
    %c0_i32_1 = arith.constant 0 : i32
    return %c0_i32, %c0_i32_0 : i32, i32
  }
}

</mosaic_0001>

<llo_original>
// kernel: policy_loss.1
$region0: #{policy_loss.1}
  #allocation0 [shape = 'u32[]', space=smem, size = 0x4, offset = 0x4, fixed_abs, tag = 'smem constant byte address 0x4 - core index']
  #allocation1 [shape = 'u32[72,128]{1,0:T(1,128)}', space=vmem, size = 0x9000, scoped, tag = 'internal scratch']
  #allocation2 [shape = 'f32[1,128]{1,0:T(1,128)}', space=vmem, size = 0x200, scoped, tag = 'scratch operand']
  %s0 = inlined_call_operand.vmem [shape: f32[1,128], index: 0, kind: input, shape index: {}]
  %s1 = inlined_call_operand.vmem [shape: f32[1,128], index: 1, kind: input, shape index: {}]
  %s2 = inlined_call_operand.hbm [shape: f32[1,1], index: 2, kind: output, shape index: {}]
  %s3 = sld [smem:[#allocation0]]
  $region26: #{policy_loss.1} parent=0
    _
  %s5 = ssub.s32 1, %s3
  %s6 = scalar_select 0, %s5, %s3
  $region1: #{policy_loss.1} parent=0
    #allocation3 [shape = 'u8[512]{0}', space=smem, size = 0x200, scoped, tag = 'output window, operand 0, single buffered']
    #allocation4 [shape = 's32[1]{0}', space=sflag, size = 0x4, scoped, tag = 'scoped memory for policy_loss.1']
    %7 = vsyncpa [#allocation4], 0
    // Predicated region
    $region2: #{policy_loss.1} parent=1 // pred_check
      _
    $region3: #{policy_loss.1} parent=1 // pred_check_branch
      %9 = sbr.rel (0) target = $region5
    $region4: #{policy_loss.1} parent=1 // pred_region
      _
    $region5: #{policy_loss.1} parent=1 // pred_fallthru
      _
    // Predicated region
    $region6: #{policy_loss.1} parent=1 // pred_check
      _
    $region7: #{policy_loss.1} parent=1 // pred_check_branch
      %11 = sbr.rel (0) target = $region9
    $region8: #{policy_loss.1} parent=1 // pred_region
      _
    $region9: #{policy_loss.1} parent=1 // pred_fallthru
      _
    %p12 = scmp.eq.s32.totalorder 0, 0
    // Predicated region
    $region10: #{policy_loss.1} parent=1 // pred_check
      %p13 = pneg %p12
    $region11: #{policy_loss.1} parent=1 // pred_check_branch
      %15 = sbr.rel (%p13) target = $region13
    $region12: #{policy_loss.1} parent=1 // pred_region
      %16 = vst [vmem:[#allocation2] sm:$0x1] 0.0
    $region13: #{policy_loss.1} parent=1 // pred_fallthru
      _
    %v17 = vld [vmem:[%s0] sm:$0x1]
    %v18 = vld [vmem:[%s1] sm:$0x1]
    %v19 = vlaneseq
    %v20 = vshrl.u32 %v19, 7
    %v21 = vlaneseq
    %v22 = vand.u32 %v21, 127
    %v23 = vstv 0
    %v24 = vadd.s32 %v23, %v20
    %v25 = vmul.u32 %v24, 128
    %v26 = vadd.s32 %v25, %v22
    %vm27 = vcmp.lt.s32.totalorder %v26, 16
    %v28 = vmax.f32 %v17, 1e-30
    %v29 = vlog2.pop %v28
    %v30 = vmul.f32 %v29, 0.6931472
    %v31 = vsub.f32 0.0, %v30
    %v32 = vmul.f32 %v31, %v18
    %v33 = vsel %vm27, %v32, 0.0
    %v34 = vld [vmem:[#allocation2] sm:$0x1]
    %v35 = vadd.f32 %v33, 0.0
    %v36 = vadd.f32 %v34, %v35
    %37 = vst [vmem:[#allocation2] sm:$0x1] %v36
    // Predicated region
    $region14: #{policy_loss.1} parent=1 // pred_check
      %p38 = pneg %p12
    $region15: #{policy_loss.1} parent=1 // pred_check_branch
      %40 = sbr.rel (%p38) target = $region17
    $region16: #{policy_loss.1} parent=1 // pred_region
      %v41 = vld [vmem:[#allocation2] sm:$0x1]
      %vm42 = vcmask 1040384
      %v43 = vsel %vm42, %v41, 0.0
      %44 = vadd.xlane.f32.xlu0 %v43
      %v45 = vpop.xlane.xlu0 %44
      %v46 = vrot.slane %v45, 4
      %v47 = vadd.f32 %v45, %v46
      %v48 = vrot.slane %v47, 2
      %v49 = vadd.f32 %v47, %v48
      %v50 = vrot.slane %v49, 1
      %v51 = vadd.f32 %v49, %v50
      %s52 = vtos %v51
      %s53 = scalar_lea.smem [#allocation3], 0
      %54 = sst [smem:[%s53]] %s52
    $region17: #{policy_loss.1} parent=1 // pred_fallthru
      _
    // Predicated region
    $region18: #{policy_loss.1} parent=1 // pred_check
      _
    $region19: #{policy_loss.1} parent=1 // pred_check_branch
      %56 = sbr.rel (0) target = $region21
    $region20: #{policy_loss.1} parent=1 // pred_region
      %58 = vsyncadd [#allocation4], 0
      %s60 = sshll.u32 %s2, 4
      %s61 = int_to_ptr.hbm [resolvable:$true] %s60
      %63 = dma.smem_to_hbm [#allocation3], 16, %s61, [#allocation4]
    $region21: #{policy_loss.1} parent=1 // pred_fallthru
      _
    // Predicated region
    $region22: #{policy_loss.1} parent=1 // pred_check
      _
    $region23: #{policy_loss.1} parent=1 // pred_check_branch
      %65 = sbr.rel (0) target = $region25
    $region24: #{policy_loss.1} parent=1 // pred_region
      %67 = dma.done [#allocation4], 16
    $region25: #{policy_loss.1} parent=1 // pred_fallthru
      _
    %68 = sfence
    %69 = vsyncpa [#allocation4], 1

</llo_original>
